<compile_context>
chip_gen: v7x
topology: tpu7x:2x2x1
jax: 0.10.0
libtpu: 0.0.40
codegen_flags: <defaults>
</compile_context>

<pallas_src>
import functools

import jax
import jax.numpy as jnp
from jax.experimental import pallas as pl
from jax.experimental.pallas import tpu as pltpu

IN_F = 3 * 4 * 4      # 48
H1 = 9 * 4 * 4        # 144
OUT_F = 17 * 17       # 289


def _sigmoid(x):
    # jnp.exp lowers to the EUP; approx reciprocal also lands on the EUP,
    # avoiding the f32 VALU divide (reciprocal + Newton) sequence.
    return pl.reciprocal(1.0 + jnp.exp(-x), approx=True)


def softmax_model_kernel(x_ref, m_ref, w1_ref, b1_ref, w2_ref, b2_ref, o_ref):
    x = x_ref[...]                                                       # (TB, 48) f32

    h1 = jnp.dot(x, w1_ref[...], preferred_element_type=jnp.float32) + b1_ref[...]
    h1 = _sigmoid(h1)                                                    # (TB, 144)

    h2 = jnp.dot(h1, w2_ref[...], preferred_element_type=jnp.float32) + b2_ref[...]
    h2 = _sigmoid(h2)                                                    # (TB, 289)

    logits = m_ref[...] * (h2 + 2.0) - 1.0                               # (TB, 289)

    # Row-wise LogSoftmax over the 289 features (== nn.LogSoftmax(dim=0)
    # applied to each 1-D row inside the PyTorch loop).
    row_max = jnp.max(logits, axis=-1, keepdims=True)
    z = logits - row_max
    lse = jnp.log(jnp.sum(jnp.exp(z), axis=-1, keepdims=True))
    o_ref[...] = (z - lse).astype(o_ref.dtype)


def _round_up(n, m):
    return ((n + m - 1) // m) * m


@functools.partial(jax.jit, static_argnames=("tile_b",))
def softmax_model_forward(x_nchw, mask_in, params, *, tile_b=512):
    w1, b1, w2, b2 = params
    B = x_nchw.shape[0]

    x = x_nchw.reshape(B, IN_F).astype(jnp.float32)      # input.view(-1, 48)
    mask = mask_in.reshape(B, OUT_F).astype(jnp.float32)  # mask.view(-1, 289)

    # Batch tile: multiple of 8 sublanes, capped at tile_b; pad B up to a
    # whole number of tiles (padded rows are sliced off at the end).
    tb = min(tile_b, _round_up(B, 8))
    pB = _round_up(B, tb)
    if pB != B:
        x = jnp.pad(x, ((0, pB - B), (0, 0)))
        mask = jnp.pad(mask, ((0, pB - B), (0, 0)))

    grid = (pl.cdiv(pB, tb),)

    flops = 2 * pB * (IN_F * H1 + H1 * OUT_F)
    transcendentals = pB * (2 * (H1 + OUT_F) + OUT_F + 1)
    bytes_accessed = 4 * (pB * (IN_F + 2 * OUT_F)
                          + IN_F * H1 + H1 * OUT_F + H1 + OUT_F)

    out = pl.pallas_call(
        softmax_model_kernel,
        out_shape=jax.ShapeDtypeStruct((pB, OUT_F), jnp.float32),
        grid=grid,
        in_specs=[
            pl.BlockSpec((tb, IN_F), lambda i: (i, 0)),      # x tile (streams)
            pl.BlockSpec((tb, OUT_F), lambda i: (i, 0)),     # mask tile (streams)
            pl.BlockSpec((IN_F, H1), lambda i: (0, 0)),      # w1 (VMEM-resident)
            pl.BlockSpec((1, H1), lambda i: (0, 0)),         # b1
            pl.BlockSpec((H1, OUT_F), lambda i: (0, 0)),     # w2
            pl.BlockSpec((1, OUT_F), lambda i: (0, 0)),      # b2
        ],
        out_specs=pl.BlockSpec((tb, OUT_F), lambda i: (i, 0)),
        compiler_params=pltpu.CompilerParams(
            dimension_semantics=("parallel",)),
        cost_estimate=pl.CostEstimate(
            flops=flops,
            transcendentals=transcendentals,
            bytes_accessed=bytes_accessed),
    )(x, mask, w1, b1, w2, b2)

    out = out[:B]
    if B == 1:
        # PyTorch returns a 1-D (289,) vector when the batch collapses to 1.
        out = out[0]
    return out


def xavier_uniform(key, fan_in, fan_out, gain=1.0):
    # torch.nn.init.xavier_uniform_ with calculate_gain('sigmoid') == 1.0.
    limit = gain * jnp.sqrt(6.0 / (fan_in + fan_out))
    # stored as (in, out) so the kernel does x @ W directly on the MXU
    return jax.random.uniform(key, (fan_in, fan_out), jnp.float32, -limit, limit)


def linear_bias_init(key, fan_in, fan_out):
    # torch default Linear bias init: U(-1/sqrt(fan_in), 1/sqrt(fan_in))
    bound = 1.0 / jnp.sqrt(float(fan_in))
    return jax.random.uniform(key, (1, fan_out), jnp.float32, -bound, bound)


def init_params(key):
    k1, k2, k3, k4 = jax.random.split(key, 4)
    w1 = xavier_uniform(k1, IN_F, H1)
    b1 = linear_bias_init(k2, IN_F, H1)
    w2 = xavier_uniform(k3, H1, OUT_F)
    b2 = linear_bias_init(k4, H1, OUT_F)
    return (w1, b1, w2, b2)


if __name__ == "__main__":
    key = jax.random.PRNGKey(0)
    pkey, xkey, mkey = jax.random.split(key, 3)
    params = init_params(pkey)

    B = 4
    x = jax.random.normal(xkey, (B, 3, 4, 4), jnp.float32)
    mask = jax.random.bernoulli(mkey, 0.5, (B, 17, 17)).astype(jnp.float32)

    out = softmax_model_forward(x, mask, params)
    out = jax.block_until_ready(out)

    # Pure-JAX reference for sanity.
    w1, b1, w2, b2 = params
    xf = x.reshape(B, IN_F)
    mf = mask.reshape(B, OUT_F)
    h1 = jax.nn.sigmoid(xf @ w1 + b1)
    h2 = jax.nn.sigmoid(h1 @ w2 + b2)
    ref = jax.nn.log_softmax(mf * (h2 + 2.0) - 1.0, axis=-1)

    assert out.shape == (B, OUT_F)
    assert jnp.allclose(out, ref, atol=5e-3), "mismatch vs reference"

    print("KERNEL_OK")
</pallas_src>

<mosaic_0001>
module attributes {stable_mosaic.version = 11 : i64} {
  func.func @softmax_model_kernel(%arg0: i32, %arg1: memref<8x48xf32, #tpu.memory_space<vmem>>, %arg2: memref<8x289xf32, #tpu.memory_space<vmem>>, %arg3: memref<48x144xf32, #tpu.memory_space<vmem>>, %arg4: memref<1x144xf32, #tpu.memory_space<vmem>>, %arg5: memref<144x289xf32, #tpu.memory_space<vmem>>, %arg6: memref<1x289xf32, #tpu.memory_space<vmem>>, %arg7: memref<8x289xf32, #tpu.memory_space<vmem>>) attributes {dimension_semantics = [#tpu.dimension_semantics<parallel>], iteration_bounds = array<i64: 1>, scalar_prefetch = 0 : i64, scratch_operands = 0 : i64, tpu.core_type = #tpu.core_type<tc>, window_params = [{transform_indices = @transform_0, window_bounds = array<i64: 8, 48>}, {transform_indices = @transform_1, window_bounds = array<i64: 8, 289>}, {pipeline_mode = #tpu.pipeline_mode<synchronous>, transform_indices = @transform_2, window_bounds = array<i64: 48, 144>}, {pipeline_mode = #tpu.pipeline_mode<synchronous>, transform_indices = @transform_3, window_bounds = array<i64: 1, 144>}, {pipeline_mode = #tpu.pipeline_mode<synchronous>, transform_indices = @transform_4, window_bounds = array<i64: 144, 289>}, {pipeline_mode = #tpu.pipeline_mode<synchronous>, transform_indices = @transform_5, window_bounds = array<i64: 1, 289>}, {transform_indices = @transform_6, window_bounds = array<i64: 8, 289>}]} {
    %c0 = arith.constant 0 : index
    %c0_0 = arith.constant 0 : index
    %0 = vector.load %arg1[%c0, %c0_0] : memref<8x48xf32, #tpu.memory_space<vmem>>, vector<8x48xf32>
    %c0_1 = arith.constant 0 : index
    %c0_2 = arith.constant 0 : index
    %1 = vector.load %arg3[%c0_1, %c0_2] : memref<48x144xf32, #tpu.memory_space<vmem>>, vector<48x144xf32>
    %cst = arith.constant dense<0.000000e+00> : vector<8x144xf32>
    %2 = tpu.matmul %0, %1, %cst {dimension_numbers = #tpu.dot_dimension_numbers<[1], [0], [0], [1], [0, 0, 1, 1], [], []>} : vector<8x48xf32>, vector<48x144xf32>, vector<8x144xf32> -> vector<8x144xf32>
    %c0_3 = arith.constant 0 : index
    %c0_4 = arith.constant 0 : index
    %3 = vector.load %arg4[%c0_3, %c0_4] : memref<1x144xf32, #tpu.memory_space<vmem>>, vector<1x144xf32>
    %4 = vector.broadcast %3 : vector<1x144xf32> to vector<8x144xf32>
    %5 = arith.addf %2, %4 : vector<8x144xf32>
    %cst_5 = arith.constant 0.000000e+00 : f32
    %6 = vector.broadcast %cst_5 : f32 to vector<8x144xf32>
    %7 = arith.subf %6, %5 : vector<8x144xf32>
    %8 = math.exp %7 : vector<8x144xf32>
    %cst_6 = arith.constant 1.000000e+00 : f32
    %9 = vector.broadcast %cst_6 : f32 to vector<8x144xf32>
    %10 = arith.addf %9, %8 : vector<8x144xf32>
    %11 = tpu.reciprocal %10 {approx = true} : vector<8x144xf32> -> vector<8x144xf32>
    %c0_7 = arith.constant 0 : index
    %c0_8 = arith.constant 0 : index
    %12 = vector.load %arg5[%c0_7, %c0_8] : memref<144x289xf32, #tpu.memory_space<vmem>>, vector<144x289xf32>
    %cst_9 = arith.constant dense<0.000000e+00> : vector<8x289xf32>
    %13 = tpu.matmul %11, %12, %cst_9 {dimension_numbers = #tpu.dot_dimension_numbers<[1], [0], [0], [1], [0, 0, 1, 1], [], []>} : vector<8x144xf32>, vector<144x289xf32>, vector<8x289xf32> -> vector<8x289xf32>
    %c0_10 = arith.constant 0 : index
    %c0_11 = arith.constant 0 : index
    %14 = vector.load %arg6[%c0_10, %c0_11] : memref<1x289xf32, #tpu.memory_space<vmem>>, vector<1x289xf32>
    %15 = vector.broadcast %14 : vector<1x289xf32> to vector<8x289xf32>
    %16 = arith.addf %13, %15 : vector<8x289xf32>
    %cst_12 = arith.constant 0.000000e+00 : f32
    %17 = vector.broadcast %cst_12 : f32 to vector<8x289xf32>
    %18 = arith.subf %17, %16 : vector<8x289xf32>
    %19 = math.exp %18 : vector<8x289xf32>
    %cst_13 = arith.constant 1.000000e+00 : f32
    %20 = vector.broadcast %cst_13 : f32 to vector<8x289xf32>
    %21 = arith.addf %20, %19 : vector<8x289xf32>
    %22 = tpu.reciprocal %21 {approx = true} : vector<8x289xf32> -> vector<8x289xf32>
    %c0_14 = arith.constant 0 : index
    %c0_15 = arith.constant 0 : index
    %23 = vector.load %arg2[%c0_14, %c0_15] : memref<8x289xf32, #tpu.memory_space<vmem>>, vector<8x289xf32>
    %cst_16 = arith.constant 2.000000e+00 : f32
    %24 = vector.broadcast %cst_16 : f32 to vector<8x289xf32>
    %25 = arith.addf %22, %24 : vector<8x289xf32>
    %26 = arith.mulf %23, %25 : vector<8x289xf32>
    %cst_17 = arith.constant 1.000000e+00 : f32
    %27 = vector.broadcast %cst_17 : f32 to vector<8x289xf32>
    %28 = arith.subf %26, %27 : vector<8x289xf32>
    %cst_18 = arith.constant dense<0xFF800000> : vector<8xf32>
    %29 = vector.multi_reduction <maximumf>, %28, %cst_18 [1] : vector<8x289xf32> to vector<8xf32>
    %30 = vector.shape_cast %29 : vector<8xf32> to vector<8x1xf32>
    %31 = vector.broadcast %30 : vector<8x1xf32> to vector<8x289xf32>
    %32 = arith.subf %28, %31 : vector<8x289xf32>
    %33 = math.exp %32 : vector<8x289xf32>
    %cst_19 = arith.constant dense<0.000000e+00> : vector<8xf32>
    %34 = vector.multi_reduction <add>, %33, %cst_19 [1] : vector<8x289xf32> to vector<8xf32>
    %35 = vector.shape_cast %34 : vector<8xf32> to vector<8x1xf32>
    %36 = math.log %35 : vector<8x1xf32>
    %37 = vector.broadcast %36 : vector<8x1xf32> to vector<8x289xf32>
    %38 = arith.subf %32, %37 : vector<8x289xf32>
    %c0_20 = arith.constant 0 : index
    %c0_21 = arith.constant 0 : index
    %39 = vector.load %arg7[%c0_20, %c0_21] : memref<8x289xf32, #tpu.memory_space<vmem>>, vector<8x289xf32>
    tpu.vector_store %arg7[%c0_20, %c0_21], %38 {strides = array<i32>} : memref<8x289xf32, #tpu.memory_space<vmem>>, vector<8x289xf32>,
    return
  }
  func.func @transform_0(%arg0: i32) -> (i32, i32) {
    %c0_i32 = arith.constant 0 : i32
    %c0_i32_0 = arith.constant 0 : i32
    return %arg0, %c0_i32 : i32, i32
  }
  func.func @transform_1(%arg0: i32) -> (i32, i32) {
    %c0_i32 = arith.constant 0 : i32
    %c0_i32_0 = arith.constant 0 : i32
    return %arg0, %c0_i32 : i32, i32
  }
  func.func @transform_2(%arg0: i32) -> (i32, i32) {
    %c0_i32 = arith.constant 0 : i32
    %c0_i32_0 = arith.constant 0 : i32
    %c0_i32_1 = arith.constant 0 : i32
    return %c0_i32, %c0_i32_0 : i32, i32
  }
  func.func @transform_3(%arg0: i32) -> (i32, i32) {
    %c0_i32 = arith.constant 0 : i32
    %c0_i32_0 = arith.constant 0 : i32
    %c0_i32_1 = arith.constant 0 : i32
    return %c0_i32, %c0_i32_0 : i32, i32
  }
  func.func @transform_4(%arg0: i32) -> (i32, i32) {
    %c0_i32 = arith.constant 0 : i32
    %c0_i32_0 = arith.constant 0 : i32
    %c0_i32_1 = arith.constant 0 : i32
    return %c0_i32, %c0_i32_0 : i32, i32
  }
  func.func @transform_5(%arg0: i32) -> (i32, i32) {
    %c0_i32 = arith.constant 0 : i32
    %c0_i32_0 = arith.constant 0 : i32
    %c0_i32_1 = arith.constant 0 : i32
    return %c0_i32, %c0_i32_0 : i32, i32
  }
  func.func @transform_6(%arg0: i32) -> (i32, i32) {
    %c0_i32 = arith.constant 0 : i32
    %c0_i32_0 = arith.constant 0 : i32
    return %arg0, %c0_i32 : i32, i32
  }
}

</mosaic_0001>

<llo_original>
// kernel: softmax_model_forward.1
$region0: #{softmax_model_forward.1}
  #allocation0 [shape = 'u32[]', space=smem, size = 0x4, offset = 0x4, fixed_abs, tag = 'smem constant byte address 0x4 - core index']
  #allocation1 [shape = 'u32[144,128]{1,0:T(1,128)}', space=vmem, size = 0x12000, scoped, tag = 'internal scratch']
  %s0 = inlined_call_operand.vmem [shape: f32[8,48], index: 0, kind: input, shape index: {}]
  %s1 = inlined_call_operand.vmem [shape: f32[8,289], index: 1, kind: input, shape index: {}]
  %s2 = inlined_call_operand.vmem [shape: f32[48,144], index: 2, kind: input, shape index: {}]
  %s3 = inlined_call_operand.vmem [shape: f32[1,144], index: 3, kind: input, shape index: {}]
  %s4 = inlined_call_operand.hbm [shape: f32[144,289], index: 4, kind: input, shape index: {}]
  %s5 = inlined_call_operand.vmem [shape: f32[1,289], index: 5, kind: input, shape index: {}]
  %s6 = inlined_call_operand.vmem [shape: f32[8,289], index: 6, kind: output, shape index: {}]
  %s7 = sld [smem:[#allocation0]]
  $region38: #{softmax_model_forward.1} parent=0
    _
  %s9 = ssub.s32 1, %s7
  %s10 = scalar_select 0, %s9, %s7
  $region1: #{softmax_model_forward.1} parent=0
    #allocation2 [shape = 'u8[221184]{0}', space=vmem, size = 0x36000, scoped, tag = 'input window, operand 4, single buffered']
    #allocation3 [shape = 's32[1]{0}', space=sflag, size = 0x4, scoped, tag = 'scoped memory for softmax_model_forward.1']
    %11 = vsyncpa [#allocation3], 0
    // Predicated region
    $region2: #{softmax_model_forward.1} parent=1 // pred_check
      _
    $region3: #{softmax_model_forward.1} parent=1 // pred_check_branch
      %13 = sbr.rel (0) target = $region5
    $region4: #{softmax_model_forward.1} parent=1 // pred_region
      _
    $region5: #{softmax_model_forward.1} parent=1 // pred_fallthru
      _
    // Predicated region
    $region6: #{softmax_model_forward.1} parent=1 // pred_check
      _
    $region7: #{softmax_model_forward.1} parent=1 // pred_check_branch
      %15 = sbr.rel (0) target = $region9
    $region8: #{softmax_model_forward.1} parent=1 // pred_region
      _
    $region9: #{softmax_model_forward.1} parent=1 // pred_fallthru
      _
    // Predicated region
    $region10: #{softmax_model_forward.1} parent=1 // pred_check
      _
    $region11: #{softmax_model_forward.1} parent=1 // pred_check_branch
      %17 = sbr.rel (0) target = $region13
    $region12: #{softmax_model_forward.1} parent=1 // pred_region
      _
    $region13: #{softmax_model_forward.1} parent=1 // pred_fallthru
      _
    // Predicated region
    $region14: #{softmax_model_forward.1} parent=1 // pred_check
      _
    $region15: #{softmax_model_forward.1} parent=1 // pred_check_branch
      %19 = sbr.rel (0) target = $region17
    $region16: #{softmax_model_forward.1} parent=1 // pred_region
      _
    $region17: #{softmax_model_forward.1} parent=1 // pred_fallthru
      _
    // Predicated region
    $region18: #{softmax_model_forward.1} parent=1 // pred_check
      _
    $region19: #{softmax_model_forward.1} parent=1 // pred_check_branch
      %21 = sbr.rel (0) target = $region21
    $region20: #{softmax_model_forward.1} parent=1 // pred_region
      %s23 = ssub.s32 6912, 6912
      %24 = vsyncadd [#allocation3], %s23
      %s25 = sshll.u32 [#allocation2], 4
      %s26 = int_to_ptr.vmem [resolvable:$true] %s25
      %31 = dma.hbm_to_vmem [thread:$0]  %s4, 6912, %s26, [#allocation3], 384, 384, 24
    $region21: #{softmax_model_forward.1} parent=1 // pred_fallthru
      _
    // Predicated region
    $region22: #{softmax_model_forward.1} parent=1 // pred_check
      _
    $region23: #{softmax_model_forward.1} parent=1 // pred_check_branch
      %33 = sbr.rel (0) target = $region25
    $region24: #{softmax_model_forward.1} parent=1 // pred_region
      _
    $region25: #{softmax_model_forward.1} parent=1 // pred_fallthru
      _
    // Predicated region
    $region26: #{softmax_model_forward.1} parent=1 // pred_check
      _
    $region27: #{softmax_model_forward.1} parent=1 // pred_check_branch
      %35 = sbr.rel (0) target = $region29
    $region28: #{softmax_model_forward.1} parent=1 // pred_region
      %36 = dma.done [#allocation3], 6912
    $region29: #{softmax_model_forward.1} parent=1 // pred_fallthru
      _
    %v37 = vld [vmem:[%s0] sm:$0xff]
    %v38 = vld [vmem:[%s2] sm:$0xff]
    %v39 = vld [vmem:[%s2 + $0x8] sm:$0xff]
    %v40 = vld [vmem:[%s2 + $0x10] sm:$0xff]
    %v41 = vld [vmem:[%s2 + $0x18] sm:$0xff]
    %v42 = vld [vmem:[%s2 + $0x20] sm:$0xff]
    %v43 = vld [vmem:[%s2 + $0x28] sm:$0xff]
    %v44 = vld [vmem:[%s2 + $0x30] sm:$0xff]
    %v45 = vld [vmem:[%s2 + $0x38] sm:$0xff]
    %v46 = vld [vmem:[%s2 + $0x40] sm:$0xff]
    %v47 = vld [vmem:[%s2 + $0x48] sm:$0xff]
    %v48 = vld [vmem:[%s2 + $0x50] sm:$0xff]
    %v49 = vld [vmem:[%s2 + $0x58] sm:$0xff]
    %v50 = vld [vmem:[%s3] sm:$0x3]
    %v52 = vlaneseq
    %v53 = vshrl.u32 %v52, 7
    %v54 = vsub.s32 0, %v53
    %v55 = vrot.slane %v50, %v54
    %v56 = vlaneseq
    %v57 = vshrl.u32 %v56, 7
    %v58 = vsub.s32 1, %v57
    %v59 = vrot.slane %v50, %v58
    %vm62 = vcmask 392192
    %v64 = vsel %vm62, %v37, 0
    %66 = vmatprep.subr.mxu0 %v39
    %67 = vmatpush1.msra.mxu0 %v38
    %68 = vmatprep.subr.mxu0 %v41
    %69 = vmatpush1.msra.mxu0 %v40
    %70 = vmatprep.subr.mxu0 %v43
    %71 = vmatpush1.msra.mxu0 %v42
    %72 = vmatprep.subr.mxu0 %v45
    %73 = vmatpush1.msra.mxu0 %v44
    %74 = vmatprep.subr.mxu0 %v47
    %75 = vmatpush1.msra.mxu0 %v46
    %76 = vmatprep.subr.mxu0 %v49
    %77 = vmatpush1.msra.mxu0 %v48
    %78 = vmatprep.subr.mxu0 0.0
    %79 = vmatpush1.msra.mxu0 0.0
    %80 = vmatprep.subr.mxu0 0.0
    %81 = vmatpush1.msra.mxu0 0.0
    %82 = vmatprep.subr.mxu0 0.0
    %83 = vmatpush1.msra.mxu0 0.0
    %84 = vmatprep.subr.mxu0 0.0
    %85 = vmatpush1.msra.mxu0 0.0
    %86 = vmatprep.subr.mxu0 0.0
    %87 = vmatpush1.msra.mxu0 0.0
    %88 = vmatprep.subr.mxu0 0.0
    %89 = vmatpush1.msra.mxu0 0.0
    %90 = vmatprep.subr.mxu0 0.0
    %91 = vmatpush1.msra.mxu0 0.0
    %92 = vmatprep.subr.mxu0 0.0
    %93 = vmatpush1.msra.mxu0 0.0
    %94 = vmatprep.subr.mxu0 0.0
    %95 = vmatpush1.msra.mxu0 0.0
    %96 = vmatprep.subr.mxu0 0.0
    %97 = vmatpush1.msra.mxu0 0.0
    %98 = vmatprep.subr.mxu0 0.0
    %99 = vmatpush1.msra.mxu0 0.0
    %100 = vmatprep.subr.mxu0 0.0
    %101 = vmatpush1.msra.mxu0 0.0
    %102 = vmatprep.subr.mxu0 0.0
    %103 = vmatpush1.msra.mxu0 0.0
    %104 = vmatprep.subr.mxu0 0.0
    %105 = vmatpush1.msra.mxu0 0.0
    %106 = vmatprep.subr.mxu0 0.0
    %107 = vmatpush1.msra.mxu0 0.0
    %108 = vmatprep.subr.mxu0 0.0
    %109 = vmatpush1.msra.mxu0 0.0
    %110 = vmatprep.subr.mxu0 0.0
    %111 = vmatpush1.msra.mxu0 0.0
    %112 = vmatprep.subr.mxu0 0.0
    %113 = vmatpush1.msra.mxu0 0.0
    %114 = vmatprep.subr.mxu0 0.0
    %115 = vmatpush1.msra.mxu0 0.0
    %116 = vmatprep.subr.mxu0 0.0
    %117 = vmatpush1.msra.mxu0 0.0
    %118 = vmatprep.subr.mxu0 0.0
    %119 = vmatpush1.msra.mxu0 0.0
    %120 = vmatprep.subr.mxu0 0.0
    %121 = vmatpush1.msra.mxu0 0.0
    %122 = vmatprep.subr.mxu0 0.0
    %123 = vmatpush1.msra.mxu0 0.0
    %124 = vmatprep.subr.mxu0 0.0
    %125 = vmatpush1.msra.mxu0 0.0
    %126 = vmatprep.subr.mxu0 0.0
    %127 = vmatpush1.msra.mxu0 0.0
    %128 = vmatprep.subr.mxu0 0.0
    %129 = vmatpush1.msra.mxu0 0.0
    %130 = vmatprep.mubr.f32.mxu0 0.0
    %131 = vmatmul.mubr.f32.gmra.mrb[0].mxu0 %v64
    %v132 = vpop.f32.mrb[0].mxu0
    %v133 = vadd.f32 %v55, %v132
    %v134 = vpop.f32.mrb[0].mxu0
    %v135 = vadd.f32 %v59, %v134
    %136 = vdwg.mxu0
    %v137 = vsub.f32 0.0, %v133
    %v138 = vsub.f32 0.0, %v135
    %v139 = vmul.f32 %v137, 1.442695
    %v140 = vpow.pop %v139
    %v141 = vmul.f32 %v138, 1.442695
    %v142 = vpow.pop %v141
    %v143 = vadd.f32 %v140, 1.0
    %v144 = vadd.f32 %v142, 1.0
    %v145 = vrcp.pop %v143
    %v146 = vrcp.pop %v144
    %v147 = vld [vmem:[#allocation2] sm:$0xff]
    %v148 = vld [vmem:[#allocation2 + $0x8] sm:$0xff]
    %v149 = vld [vmem:[#allocation2 + $0x10] sm:$0xff]
    %v150 = vld [vmem:[#allocation2 + $0x18] sm:$0xff]
    %v151 = vld [vmem:[#allocation2 + $0x20] sm:$0xff]
    %v152 = vld [vmem:[#allocation2 + $0x28] sm:$0xff]
    %v153 = vld [vmem:[#allocation2 + $0x30] sm:$0xff]
    %v154 = vld [vmem:[#allocation2 + $0x38] sm:$0xff]
    %v155 = vld [vmem:[#allocation2 + $0x40] sm:$0xff]
    %v156 = vld [vmem:[#allocation2 + $0x48] sm:$0xff]
    %v157 = vld [vmem:[#allocation2 + $0x50] sm:$0xff]
    %v158 = vld [vmem:[#allocation2 + $0x58] sm:$0xff]
    %v159 = vld [vmem:[#allocation2 + $0x60] sm:$0xff]
    %v160 = vld [vmem:[#allocation2 + $0x68] sm:$0xff]
    %v161 = vld [vmem:[#allocation2 + $0x70] sm:$0xff]
    %v162 = vld [vmem:[#allocation2 + $0x78] sm:$0xff]
    %v163 = vld [vmem:[#allocation2 + $0x80] sm:$0xff]
    %v164 = vld [vmem:[#allocation2 + $0x88] sm:$0xff]
    %v165 = vld [vmem:[#allocation2 + $0x90] sm:$0xff]
    %v166 = vld [vmem:[#allocation2 + $0x98] sm:$0xff]
    %v167 = vld [vmem:[#allocation2 + $0xa0] sm:$0xff]
    %v168 = vld [vmem:[#allocation2 + $0xa8] sm:$0xff]
    %v169 = vld [vmem:[#allocation2 + $0xb0] sm:$0xff]
    %v170 = vld [vmem:[#allocation2 + $0xb8] sm:$0xff]
    %v171 = vld [vmem:[#allocation2 + $0xc0] sm:$0xff]
    %v172 = vld [vmem:[#allocation2 + $0xc8] sm:$0xff]
    %v173 = vld [vmem:[#allocation2 + $0xd0] sm:$0xff]
    %v174 = vld [vmem:[#allocation2 + $0xd8] sm:$0xff]
    %v175 = vld [vmem:[#allocation2 + $0xe0] sm:$0xff]
    %v176 = vld [vmem:[#allocation2 + $0xe8] sm:$0xff]
    %v177 = vld [vmem:[#allocation2 + $0xf0] sm:$0xff]
    %v178 = vld [vmem:[#allocation2 + $0xf8] sm:$0xff]
    %v179 = vld [vmem:[#allocation2 + $0x100] sm:$0xff]
    %v180 = vld [vmem:[#allocation2 + $0x108] sm:$0xff]
    %v181 = vld [vmem:[#allocation2 + $0x110] sm:$0xff]
    %v182 = vld [vmem:[#allocation2 + $0x118] sm:$0xff]
    %v183 = vld [vmem:[#allocation2 + $0x120] sm:$0xff]
    %v184 = vld [vmem:[#allocation2 + $0x128] sm:$0xff]
    %v185 = vld [vmem:[#allocation2 + $0x130] sm:$0xff]
    %v186 = vld [vmem:[#allocation2 + $0x138] sm:$0xff]
    %v187 = vld [vmem:[#allocation2 + $0x140] sm:$0xff]
    %v188 = vld [vmem:[#allocation2 + $0x148] sm:$0xff]
    %v189 = vld [vmem:[#allocation2 + $0x150] sm:$0xff]
    %v190 = vld [vmem:[#allocation2 + $0x158] sm:$0xff]
    %v191 = vld [vmem:[#allocation2 + $0x160] sm:$0xff]
    %v192 = vld [vmem:[#allocation2 + $0x168] sm:$0xff]
    %v193 = vld [vmem:[#allocation2 + $0x170] sm:$0xff]
    %v194 = vld [vmem:[#allocation2 + $0x178] sm:$0xff]
    %v195 = vld [vmem:[#allocation2 + $0x180] sm:$0xff]
    %v196 = vld [vmem:[#allocation2 + $0x188] sm:$0xff]
    %v197 = vld [vmem:[#allocation2 + $0x190] sm:$0xff]
    %v198 = vld [vmem:[#allocation2 + $0x198] sm:$0xff]
    %v199 = vld [vmem:[#allocation2 + $0x1a0] sm:$0xff]
    %v200 = vld [vmem:[#allocation2 + $0x1a8] sm:$0xff]
    %v201 = vld [vmem:[%s5] sm:$0x7]
    %v203 = vlaneseq
    %v204 = vshrl.u32 %v203, 7
    %v205 = vsub.s32 0, %v204
    %v206 = vrot.slane %v201, %v205
    %v207 = vlaneseq
    %v208 = vshrl.u32 %v207, 7
    %v209 = vsub.s32 1, %v208
    %v210 = vrot.slane %v201, %v209
    %v211 = vlaneseq
    %v212 = vshrl.u32 %v211, 7
    %v213 = vsub.s32 2, %v212
    %v214 = vrot.slane %v201, %v213
    %vm218 = vcmask 130048
    %v220 = vsel %vm218, %v146, 0
    %222 = vmatprep.subr.mxu0 %v148
    %223 = vmatpush1.msra.mxu0 %v147
    %224 = vmatprep.subr.mxu0 %v151
    %225 = vmatpush1.msra.mxu0 %v150
    %226 = vmatprep.subr.mxu0 %v154
    %227 = vmatpush1.msra.mxu0 %v153
    %228 = vmatprep.subr.mxu0 %v157
    %229 = vmatpush1.msra.mxu0 %v156
    %230 = vmatprep.subr.mxu0 %v160
    %231 = vmatpush1.msra.mxu0 %v159
    %232 = vmatprep.subr.mxu0 %v163
    %233 = vmatpush1.msra.mxu0 %v162
    %234 = vmatprep.subr.mxu0 %v166
    %235 = vmatpush1.msra.mxu0 %v165
    %236 = vmatprep.subr.mxu0 %v169
    %237 = vmatpush1.msra.mxu0 %v168
    %238 = vmatprep.subr.mxu0 %v172
    %239 = vmatpush1.msra.mxu0 %v171
    %240 = vmatprep.subr.mxu0 %v175
    %241 = vmatpush1.msra.mxu0 %v174
    %242 = vmatprep.subr.mxu0 %v178
    %243 = vmatpush1.msra.mxu0 %v177
    %244 = vmatprep.subr.mxu0 %v181
    %245 = vmatpush1.msra.mxu0 %v180
    %246 = vmatprep.subr.mxu0 %v184
    %247 = vmatpush1.msra.mxu0 %v183
    %248 = vmatprep.subr.mxu0 %v187
    %249 = vmatpush1.msra.mxu0 %v186
    %250 = vmatprep.subr.mxu0 %v190
    %251 = vmatpush1.msra.mxu0 %v189
    %252 = vmatprep.subr.mxu0 %v193
    %253 = vmatpush1.msra.mxu0 %v192
    %254 = vmatprep.subr.mxu0 %v196
    %255 = vmatpush1.msra.mxu0 %v195
    %256 = vmatprep.subr.mxu0 %v199
    %257 = vmatpush1.msra.mxu0 %v198
    %258 = vmatprep.subr.mxu0 0.0
    %259 = vmatpush1.msra.mxu0 0.0
    %260 = vmatprep.subr.mxu0 0.0
    %261 = vmatpush1.msra.mxu0 0.0
    %262 = vmatprep.subr.mxu0 0.0
    %263 = vmatpush1.msra.mxu0 0.0
    %264 = vmatprep.subr.mxu0 0.0
    %265 = vmatpush1.msra.mxu0 0.0
    %266 = vmatprep.subr.mxu0 0.0
    %267 = vmatpush1.msra.mxu0 0.0
    %268 = vmatprep.subr.mxu0 0.0
    %269 = vmatpush1.msra.mxu0 0.0
    %270 = vmatprep.subr.mxu0 0.0
    %271 = vmatpush1.msra.mxu0 0.0
    %272 = vmatprep.subr.mxu0 0.0
    %273 = vmatpush1.msra.mxu0 0.0
    %274 = vmatprep.subr.mxu0 0.0
    %275 = vmatpush1.msra.mxu0 0.0
    %276 = vmatprep.subr.mxu0 0.0
    %277 = vmatpush1.msra.mxu0 0.0
    %278 = vmatprep.subr.mxu0 0.0
    %279 = vmatpush1.msra.mxu0 0.0
    %280 = vmatprep.subr.mxu0 0.0
    %281 = vmatpush1.msra.mxu0 0.0
    %282 = vmatprep.subr.mxu0 0.0
    %283 = vmatpush1.msra.mxu0 0.0
    %284 = vmatprep.subr.mxu0 0.0
    %285 = vmatpush1.msra.mxu0 0.0
    %286 = vmatprep.mubr.f32.mxu0 %v220
    %287 = vmatmul.mubr.f32.gmra.mrb[0].mxu0 %v145
    %v288 = vpop.f32.mrb[0].mxu0
    %v289 = vadd.f32 %v206, %v288
    %v290 = vpop.f32.mrb[0].mxu0
    %v291 = vadd.f32 %v210, %v290
    %292 = vdwg.mxu0
    %293 = vmatprep.subr.mxu0 0.0
    %294 = vmatpush1.msra.mxu0 %v149
    %295 = vmatprep.subr.mxu0 0.0
    %296 = vmatpush1.msra.mxu0 %v152
    %297 = vmatprep.subr.mxu0 0.0
    %298 = vmatpush1.msra.mxu0 %v155
    %299 = vmatprep.subr.mxu0 0.0
    %300 = vmatpush1.msra.mxu0 %v158
    %301 = vmatprep.subr.mxu0 0.0
    %302 = vmatpush1.msra.mxu0 %v161
    %303 = vmatprep.subr.mxu0 0.0
    %304 = vmatpush1.msra.mxu0 %v164
    %305 = vmatprep.subr.mxu0 0.0
    %306 = vmatpush1.msra.mxu0 %v167
    %307 = vmatprep.subr.mxu0 0.0
    %308 = vmatpush1.msra.mxu0 %v170
    %309 = vmatprep.subr.mxu0 0.0
    %310 = vmatpush1.msra.mxu0 %v173
    %311 = vmatprep.subr.mxu0 0.0
    %312 = vmatpush1.msra.mxu0 %v176
    %313 = vmatprep.subr.mxu0 0.0
    %314 = vmatpush1.msra.mxu0 %v179
    %315 = vmatprep.subr.mxu0 0.0
    %316 = vmatpush1.msra.mxu0 %v182
    %317 = vmatprep.subr.mxu0 0.0
    %318 = vmatpush1.msra.mxu0 %v185
    %319 = vmatprep.subr.mxu0 0.0
    %320 = vmatpush1.msra.mxu0 %v188
    %321 = vmatprep.subr.mxu0 0.0
    %322 = vmatpush1.msra.mxu0 %v191
    %323 = vmatprep.subr.mxu0 0.0
    %324 = vmatpush1.msra.mxu0 %v194
    %325 = vmatprep.subr.mxu0 0.0
    %326 = vmatpush1.msra.mxu0 %v197
    %327 = vmatprep.subr.mxu0 0.0
    %328 = vmatpush1.msra.mxu0 %v200
    %329 = vmatprep.subr.mxu0 0.0
    %330 = vmatpush1.msra.mxu0 0.0
    %331 = vmatprep.subr.mxu0 0.0
    %332 = vmatpush1.msra.mxu0 0.0
    %333 = vmatprep.subr.mxu0 0.0
    %334 = vmatpush1.msra.mxu0 0.0
    %335 = vmatprep.subr.mxu0 0.0
    %336 = vmatpush1.msra.mxu0 0.0
    %337 = vmatprep.subr.mxu0 0.0
    %338 = vmatpush1.msra.mxu0 0.0
    %339 = vmatprep.subr.mxu0 0.0
    %340 = vmatpush1.msra.mxu0 0.0
    %341 = vmatprep.subr.mxu0 0.0
    %342 = vmatpush1.msra.mxu0 0.0
    %343 = vmatprep.subr.mxu0 0.0
    %344 = vmatpush1.msra.mxu0 0.0
    %345 = vmatprep.subr.mxu0 0.0
    %346 = vmatpush1.msra.mxu0 0.0
    %347 = vmatprep.subr.mxu0 0.0
    %348 = vmatpush1.msra.mxu0 0.0
    %349 = vmatprep.subr.mxu0 0.0
    %350 = vmatpush1.msra.mxu0 0.0
    %351 = vmatprep.subr.mxu0 0.0
    %352 = vmatpush1.msra.mxu0 0.0
    %353 = vmatprep.subr.mxu0 0.0
    %354 = vmatpush1.msra.mxu0 0.0
    %355 = vmatprep.subr.mxu0 0.0
    %356 = vmatpush1.msra.mxu0 0.0
    %357 = vmatprep.mubr.f32.mxu0 %v220
    %358 = vmatmul.mubr.f32.gmra.mrb[0].mxu0 %v145
    %v359 = vpop.f32.mrb[0].mxu0
    %v360 = vadd.f32 %v214, %v359
    %v361 = vpop.f32.mrb[0].mxu0
    %362 = vdwg.mxu0
    %v363 = vsub.f32 0.0, %v289
    %v364 = vsub.f32 0.0, %v291
    %v365 = vsub.f32 0.0, %v360
    %v366 = vmul.f32 %v363, 1.442695
    %v367 = vpow.pop %v366
    %v368 = vmul.f32 %v364, 1.442695
    %v369 = vpow.pop %v368
    %v370 = vmul.f32 %v365, 1.442695
    %v371 = vpow.pop %v370
    %v372 = vadd.f32 %v367, 1.0
    %v373 = vadd.f32 %v369, 1.0
    %v374 = vadd.f32 %v371, 1.0
    %v375 = vrcp.pop %v372
    %v376 = vrcp.pop %v373
    %v377 = vrcp.pop %v374
    %v378 = vld [vmem:[%s1] sm:$0xff]
    %v379 = vld [vmem:[%s1 + $0x8] sm:$0xff]
    %v380 = vld [vmem:[%s1 + $0x10] sm:$0xff]
    %v381 = vadd.f32 %v375, 2.0
    %v382 = vadd.f32 %v376, 2.0
    %v383 = vadd.f32 %v377, 2.0
    %v384 = vmul.f32 %v378, %v381
    %v385 = vmul.f32 %v379, %v382
    %v386 = vmul.f32 %v380, %v383
    %v387 = vsub.f32 %v384, 1.0
    %v388 = vsub.f32 %v385, 1.0
    %v389 = vsub.f32 %v386, 1.0
    %vm390 = vcmask 269312
    %v391 = vsel %vm390, %v389, -inf
    %v392 = vmax.f32 %v387, %v388
    %v393 = vmax.f32 %v392, %v391
    %394 = vmax.xlane.f32.xlu0 %v393
    %v395 = vpop.xlane.xlu0 %394
    %v396 = vsub.f32 %v387, %v395
    %v397 = vsub.f32 %v388, %v395
    %v398 = vsub.f32 %v389, %v395
    %v399 = vmul.f32 %v396, 1.442695
    %v400 = vpow.pop %v399
    %v401 = vmul.f32 %v397, 1.442695
    %v402 = vpow.pop %v401
    %v403 = vmul.f32 %v398, 1.442695
    %v404 = vpow.pop %v403
    %v405 = vadd.f32 %v400, %v402
    %v406 = vsel %vm390, %v404, 0.0
    %v407 = vadd.f32 %v405, %v406
    %408 = vadd.xlane.f32.xlu0 %v407
    %v409 = vpop.xlane.xlu0 %408
    %v410 = vlog2.pop %v409
    %v411 = vmul.f32 %v410, 0.6931472
    %v412 = vsub.f32 %v396, %v411
    %v413 = vsub.f32 %v397, %v411
    %v414 = vsub.f32 %v398, %v411
    %415 = vst [vmem:[%s6] sm:$0xff] %v412
    %416 = vst [vmem:[%s6 + $0x8] sm:$0xff] %v413
    %417 = vst.msk [vmem:[%s6 + $0x10] sm:$0xff] %vm390, %v414
    // Predicated region
    $region30: #{softmax_model_forward.1} parent=1 // pred_check
      _
    $region31: #{softmax_model_forward.1} parent=1 // pred_check_branch
      %419 = sbr.rel (0) target = $region33
    $region32: #{softmax_model_forward.1} parent=1 // pred_region
      _
    $region33: #{softmax_model_forward.1} parent=1 // pred_fallthru
      _
    // Predicated region
    $region34: #{softmax_model_forward.1} parent=1 // pred_check
      _
    $region35: #{softmax_model_forward.1} parent=1 // pred_check_branch
      %421 = sbr.rel (0) target = $region37
    $region36: #{softmax_model_forward.1} parent=1 // pred_region
      _
    $region37: #{softmax_model_forward.1} parent=1 // pred_fallthru
      _
    %422 = vsyncpa [#allocation3], 1

</llo_original>
